<compile_context>
chip_gen: v6e
topology: v6e:2x2x1
jax: 0.10.0
libtpu: 0.0.40
codegen_flags: <defaults>
</compile_context>

<pallas_src>
import math

import jax
import jax.numpy as jnp
from jax.experimental import pallas as pl
from jax.experimental.pallas import tpu as pltpu


def time_embedding_kernel(t_ref, emb_ref, w1_ref, b1_ref, w2_ref, b2_ref, out_ref):
    """All refs are whole arrays resident in VMEM.

    t_ref:   (B, 1)         int32 clamped timesteps
    emb_ref: (T, d_model)   f32 embedding table (trainable parameter)
    w1_ref:  (d_model, dim) f32
    b1_ref:  (1, dim)       f32
    w2_ref:  (dim, dim)     f32
    b2_ref:  (1, dim)       f32
    out_ref: (B, dim)       f32
    """
    B = out_ref.shape[0]
    T = emb_ref.shape[0]

    # Vectorized embedding gather: (B,T) one-hot @ (T,d_model) table on the MXU.
    t = t_ref[...]                                                    # (B, 1) int32
    ids = jax.lax.broadcasted_iota(jnp.int32, (B, T), 1)              # (B, T)
    one_hot = (ids == t).astype(emb_ref.dtype)                        # (B, T)
    x = jnp.dot(one_hot, emb_ref[...],
                preferred_element_type=jnp.float32)                   # (B, d_model)

    # Linear(d_model -> dim) + Swish (sigmoid runs on the EUP slot).
    h = jnp.dot(x, w1_ref[...], preferred_element_type=jnp.float32) + b1_ref[...]
    h = h * jax.nn.sigmoid(h)

    # Linear(dim -> dim)
    y = jnp.dot(h, w2_ref[...], preferred_element_type=jnp.float32) + b2_ref[...]
    out_ref[...] = y.astype(out_ref.dtype)


def time_embedding(t, emb_table, w1, b1, w2, b2):
    B = t.shape[0]
    T, d_model = emb_table.shape
    dim = w1.shape[1]

    # Clamp in the wrapper: TPU performs no runtime bounds check, and PyTorch's
    # nn.Embedding would raise on out-of-range indices anyway.
    t2d = jnp.clip(t.astype(jnp.int32), 0, T - 1).reshape(B, 1)

    flops = 2 * B * (T * d_model + d_model * dim + dim * dim) + 4 * B * dim
    bytes_accessed = 4 * (B + T * d_model + d_model * dim + dim
                          + dim * dim + dim + B * dim)
    cost = pl.CostEstimate(flops=flops,
                           transcendentals=B * dim,
                           bytes_accessed=bytes_accessed)

    vmem = pl.BlockSpec(memory_space=pltpu.MemorySpace.VMEM)
    # NOTE: at realistic diffusion sizes (T ~ 1000, large B / dim) prefer
    #  (a) keeping the table in HBM (pl.ANY) and DMA-gathering only the B used
    #      rows (or letting the consumer fuse this MLP),
    #  (b) bf16 weights/activations with f32 accumulation, and
    #  (c) a "parallel" grid axis over B blocks so v7x's two TensorCores split
    #      the batch.
    # At these sizes a single un-pipelined whole-array pass is strictly cheaper.
    return pl.pallas_call(
        time_embedding_kernel,
        out_shape=jax.ShapeDtypeStruct((B, dim), jnp.float32),
        in_specs=[vmem] * 6,
        out_specs=vmem,
        cost_estimate=cost,
    )(t2d, emb_table, w1, b1.reshape(1, dim), w2, b2.reshape(1, dim))


def make_sinusoidal_table(T, d_model):
    """Exactly mirrors the PyTorch __init__ construction (interleaved sin/cos)."""
    assert d_model % 2 == 0
    emb = jnp.arange(0.0, d_model, step=2, dtype=jnp.float32) / d_model * math.log(10000.0)
    emb = jnp.exp(-emb)                                            # (d_model//2,)
    pos = jnp.arange(T, dtype=jnp.float32)                         # (T,)
    ang = pos[:, None] * emb[None, :]                              # (T, d_model//2)
    table = jnp.stack([jnp.sin(ang), jnp.cos(ang)], axis=-1)       # (T, d_model//2, 2)
    return table.reshape(T, d_model)                               # (T, d_model)


def init_linear(key, fan_in, fan_out):
    # Deterministic init mimicking nn.Linear default: U(-1/sqrt(fan_in), +1/sqrt(fan_in))
    kw, kb = jax.random.split(key)
    bound = 1.0 / math.sqrt(fan_in)
    w = jax.random.uniform(kw, (fan_in, fan_out), jnp.float32, -bound, bound)
    b = jax.random.uniform(kb, (fan_out,), jnp.float32, -bound, bound)
    return w, b


def reference(t, emb_table, w1, b1, w2, b2):
    x = emb_table[t]
    h = x @ w1 + b1
    h = h * jax.nn.sigmoid(h)
    return h @ w2 + b2


if __name__ == "__main__":
    # Small, lane-dense shapes consistent with the module: T timesteps, d_model, dim.
    T, d_model, dim, B = 64, 128, 128, 8

    key = jax.random.PRNGKey(0)
    k_t, k_l1, k_l2 = jax.random.split(key, 3)

    emb_table = make_sinusoidal_table(T, d_model)
    w1, b1 = init_linear(k_l1, d_model, dim)
    w2, b2 = init_linear(k_l2, dim, dim)

    t = jax.random.randint(k_t, (B,), 0, T, dtype=jnp.int32)

    out = jax.block_until_ready(time_embedding(t, emb_table, w1, b1, w2, b2))

    ref = reference(t, emb_table, w1, b1, w2, b2)
    assert out.shape == (B, dim)
    err = jnp.max(jnp.abs(out - ref))
    assert jnp.allclose(out, ref, rtol=1e-4, atol=1e-4), f"mismatch vs reference: max abs err = {err}"

    print("KERNEL_OK")
</pallas_src>

<mosaic_0001>
module attributes {stable_mosaic.version = 11 : i64} {
  func.func @time_embedding_kernel(%arg0: memref<8x1xi32, #tpu.memory_space<vmem>>, %arg1: memref<64x128xf32, #tpu.memory_space<vmem>>, %arg2: memref<128x128xf32, #tpu.memory_space<vmem>>, %arg3: memref<1x128xf32, #tpu.memory_space<vmem>>, %arg4: memref<128x128xf32, #tpu.memory_space<vmem>>, %arg5: memref<1x128xf32, #tpu.memory_space<vmem>>, %arg6: memref<8x128xf32, #tpu.memory_space<vmem>>) attributes {dimension_semantics = [], scalar_prefetch = 0 : i64, scratch_operands = 0 : i64, tpu.core_type = #tpu.core_type<tc>} {
    %c0 = arith.constant 0 : index
    %c0_0 = arith.constant 0 : index
    %0 = vector.load %arg0[%c0, %c0_0] : memref<8x1xi32, #tpu.memory_space<vmem>>, vector<8x1xi32>
    %1 = tpu.iota {dimensions = array<i32: 1>} : vector<8x64xi32>
    %2 = vector.broadcast %0 : vector<8x1xi32> to vector<8x64xi32>
    %3 = arith.cmpi eq, %1, %2 : vector<8x64xi32>
    %4 = arith.extui %3 : vector<8x64xi1> to vector<8x64xi32>
    %5 = arith.sitofp %4 : vector<8x64xi32> to vector<8x64xf32>
    %c0_1 = arith.constant 0 : index
    %c0_2 = arith.constant 0 : index
    %6 = vector.load %arg1[%c0_1, %c0_2] : memref<64x128xf32, #tpu.memory_space<vmem>>, vector<64x128xf32>
    %cst = arith.constant dense<0.000000e+00> : vector<8x128xf32>
    %7 = tpu.matmul %5, %6, %cst {dimension_numbers = #tpu.dot_dimension_numbers<[1], [0], [0], [1], [0, 0, 1, 1], [], []>} : vector<8x64xf32>, vector<64x128xf32>, vector<8x128xf32> -> vector<8x128xf32>
    %c0_3 = arith.constant 0 : index
    %c0_4 = arith.constant 0 : index
    %8 = vector.load %arg2[%c0_3, %c0_4] : memref<128x128xf32, #tpu.memory_space<vmem>>, vector<128x128xf32>
    %cst_5 = arith.constant dense<0.000000e+00> : vector<8x128xf32>
    %9 = tpu.matmul %7, %8, %cst_5 {dimension_numbers = #tpu.dot_dimension_numbers<[1], [0], [0], [1], [0, 0, 1, 1], [], []>} : vector<8x128xf32>, vector<128x128xf32>, vector<8x128xf32> -> vector<8x128xf32>
    %c0_6 = arith.constant 0 : index
    %c0_7 = arith.constant 0 : index
    %10 = vector.load %arg3[%c0_6, %c0_7] : memref<1x128xf32, #tpu.memory_space<vmem>>, vector<1x128xf32>
    %11 = vector.broadcast %10 : vector<1x128xf32> to vector<8x128xf32>
    %12 = arith.addf %9, %11 : vector<8x128xf32>
    %13 = arith.negf %12 : vector<8x128xf32>
    %14 = math.exp %13 : vector<8x128xf32>
    %cst_8 = arith.constant 1.000000e+00 : f32
    %15 = vector.broadcast %cst_8 : f32 to vector<8x128xf32>
    %16 = arith.addf %15, %14 : vector<8x128xf32>
    %17 = arith.divf %15, %16 : vector<8x128xf32>
    %18 = arith.mulf %12, %17 : vector<8x128xf32>
    %c0_9 = arith.constant 0 : index
    %c0_10 = arith.constant 0 : index
    %19 = vector.load %arg4[%c0_9, %c0_10] : memref<128x128xf32, #tpu.memory_space<vmem>>, vector<128x128xf32>
    %cst_11 = arith.constant dense<0.000000e+00> : vector<8x128xf32>
    %20 = tpu.matmul %18, %19, %cst_11 {dimension_numbers = #tpu.dot_dimension_numbers<[1], [0], [0], [1], [0, 0, 1, 1], [], []>} : vector<8x128xf32>, vector<128x128xf32>, vector<8x128xf32> -> vector<8x128xf32>
    %c0_12 = arith.constant 0 : index
    %c0_13 = arith.constant 0 : index
    %21 = vector.load %arg5[%c0_12, %c0_13] : memref<1x128xf32, #tpu.memory_space<vmem>>, vector<1x128xf32>
    %22 = vector.broadcast %21 : vector<1x128xf32> to vector<8x128xf32>
    %23 = arith.addf %20, %22 : vector<8x128xf32>
    %c0_14 = arith.constant 0 : index
    %c0_15 = arith.constant 0 : index
    %24 = vector.load %arg6[%c0_14, %c0_15] : memref<8x128xf32, #tpu.memory_space<vmem>>, vector<8x128xf32>
    tpu.vector_store %arg6[%c0_14, %c0_15], %23 {strides = array<i32>} : memref<8x128xf32, #tpu.memory_space<vmem>>, vector<8x128xf32>,
    return
  }
}

</mosaic_0001>

<llo_original>
// kernel: tpu_custom_call.1
$region0: #{tpu_custom_call.1}
  #allocation0 [shape = 'u32[]', space=smem, size = 0x4, offset = 0x4, fixed_abs, tag = 'smem constant byte address 0x4 - core index']
  #allocation1 [shape = 'u32[144,128]{1,0:T(1,128)}', space=vmem, size = 0x12000, scoped, tag = 'internal scratch']
  %s0 = inlined_call_operand.vmem [shape: s32[8,1], index: 0, kind: input, shape index: {}]
  %s1 = inlined_call_operand.hbm [shape: f32[64,128], index: 1, kind: input, shape index: {}]
  %s2 = inlined_call_operand.hbm [shape: f32[128,128], index: 2, kind: input, shape index: {}]
  %s3 = inlined_call_operand.vmem [shape: f32[1,128], index: 3, kind: input, shape index: {}]
  %s4 = inlined_call_operand.hbm [shape: f32[128,128], index: 4, kind: input, shape index: {}]
  %s5 = inlined_call_operand.vmem [shape: f32[1,128], index: 5, kind: input, shape index: {}]
  %s6 = inlined_call_operand.hbm [shape: f32[8,128], index: 6, kind: output, shape index: {}]
  %s7 = sld [smem:[#allocation0]]
  $region46: #{tpu_custom_call.1} parent=0
    _
  %s9 = ssub.s32 1, %s7
  %s10 = scalar_select 0, %s9, %s7
  $region1: #{tpu_custom_call.1} parent=0
    #allocation2 [shape = 'u8[32768]{0}', space=vmem, size = 0x8000, scoped, tag = 'input window, operand 1, single buffered']
    #allocation3 [shape = 's32[1]{0}', space=sflag, size = 0x4, scoped, tag = 'scoped memory for tpu_custom_call.1']
    #allocation4 [shape = 's32[1]{0}', space=sflag, size = 0x4, scoped, tag = 'scoped memory for tpu_custom_call.1']
    #allocation5 [shape = 'u8[65536]{0}', space=vmem, size = 0x10000, scoped, tag = 'input window, operand 2, single buffered']
    #allocation6 [shape = 's32[1]{0}', space=sflag, size = 0x4, scoped, tag = 'scoped memory for tpu_custom_call.1']
    #allocation7 [shape = 'u8[65536]{0}', space=vmem, size = 0x10000, scoped, tag = 'input window, operand 4, single buffered']
    #allocation8 [shape = 'u8[4096]{0}', space=vmem, size = 0x1000, scoped, tag = 'output window, operand 0, single buffered']
    %11 = vsyncpa [#allocation3], 0
    %12 = vsyncpa [#allocation6], 0
    %13 = vsyncpa [#allocation4], 0
    // Predicated region
    $region2: #{tpu_custom_call.1} parent=1 // pred_check
      _
    $region3: #{tpu_custom_call.1} parent=1 // pred_check_branch
      %15 = sbr.rel (0) target = $region5
    $region4: #{tpu_custom_call.1} parent=1 // pred_region
      _
    $region5: #{tpu_custom_call.1} parent=1 // pred_fallthru
      _
    // Predicated region
    $region6: #{tpu_custom_call.1} parent=1 // pred_check
      _
    $region7: #{tpu_custom_call.1} parent=1 // pred_check_branch
      %17 = sbr.rel (0) target = $region9
    $region8: #{tpu_custom_call.1} parent=1 // pred_region
      %s19 = ssub.s32 1024, 1024
      %20 = vsyncadd [#allocation3], %s19
      %s21 = sshll.u32 [#allocation2], 4
      %s22 = int_to_ptr.vmem [resolvable:$true] %s21
      %27 = dma.hbm_to_vmem [thread:$0]  %s1, 1024, %s22, [#allocation3], 128, 128, 8
    $region9: #{tpu_custom_call.1} parent=1 // pred_fallthru
      _
    // Predicated region
    $region10: #{tpu_custom_call.1} parent=1 // pred_check
      _
    $region11: #{tpu_custom_call.1} parent=1 // pred_check_branch
      %29 = sbr.rel (0) target = $region13
    $region12: #{tpu_custom_call.1} parent=1 // pred_region
      %s31 = ssub.s32 2048, 2048
      %32 = vsyncadd [#allocation6], %s31
      %s33 = sshll.u32 [#allocation5], 4
      %s34 = int_to_ptr.vmem [resolvable:$true] %s33
      %39 = dma.hbm_to_vmem [thread:$0]  %s2, 2048, %s34, [#allocation6], 128, 128, 8
    $region13: #{tpu_custom_call.1} parent=1 // pred_fallthru
      _
    // Predicated region
    $region14: #{tpu_custom_call.1} parent=1 // pred_check
      _
    $region15: #{tpu_custom_call.1} parent=1 // pred_check_branch
      %41 = sbr.rel (0) target = $region17
    $region16: #{tpu_custom_call.1} parent=1 // pred_region
      _
    $region17: #{tpu_custom_call.1} parent=1 // pred_fallthru
      _
    // Predicated region
    $region18: #{tpu_custom_call.1} parent=1 // pred_check
      _
    $region19: #{tpu_custom_call.1} parent=1 // pred_check_branch
      %43 = sbr.rel (0) target = $region21
    $region20: #{tpu_custom_call.1} parent=1 // pred_region
      %s45 = ssub.s32 2048, 2048
      %46 = vsyncadd [#allocation6], %s45
      %s47 = sshll.u32 [#allocation7], 4
      %s48 = int_to_ptr.vmem [resolvable:$true] %s47
      %53 = dma.hbm_to_vmem [thread:$0]  %s4, 2048, %s48, [#allocation6], 128, 128, 8
    $region21: #{tpu_custom_call.1} parent=1 // pred_fallthru
      _
    // Predicated region
    $region22: #{tpu_custom_call.1} parent=1 // pred_check
      _
    $region23: #{tpu_custom_call.1} parent=1 // pred_check_branch
      %55 = sbr.rel (0) target = $region25
    $region24: #{tpu_custom_call.1} parent=1 // pred_region
      _
    $region25: #{tpu_custom_call.1} parent=1 // pred_fallthru
      _
    // Predicated region
    $region26: #{tpu_custom_call.1} parent=1 // pred_check
      _
    $region27: #{tpu_custom_call.1} parent=1 // pred_check_branch
      %57 = sbr.rel (0) target = $region29
    $region28: #{tpu_custom_call.1} parent=1 // pred_region
      %58 = dma.done [#allocation3], 1024
    $region29: #{tpu_custom_call.1} parent=1 // pred_fallthru
      _
    // Predicated region
    $region30: #{tpu_custom_call.1} parent=1 // pred_check
      _
    $region31: #{tpu_custom_call.1} parent=1 // pred_check_branch
      %60 = sbr.rel (0) target = $region33
    $region32: #{tpu_custom_call.1} parent=1 // pred_region
      %61 = dma.done [#allocation6], 2048
    $region33: #{tpu_custom_call.1} parent=1 // pred_fallthru
      _
    // Predicated region
    $region34: #{tpu_custom_call.1} parent=1 // pred_check
      _
    $region35: #{tpu_custom_call.1} parent=1 // pred_check_branch
      %63 = sbr.rel (0) target = $region37
    $region36: #{tpu_custom_call.1} parent=1 // pred_region
      %64 = dma.done [#allocation6], 2048
    $region37: #{tpu_custom_call.1} parent=1 // pred_fallthru
      _
    %v65 = vld [vmem:[%s0] sm:$0xff]
    %v66 = vlaneseq
    %v67 = vand.u32 %v66, 127
    %68 = vset.pattern.permute.xlu0 0
    %69 = vperm.xlu0 %68, %v65
    %v70 = vpop.permute.xlu0 %69
    %vm71 = vcmp.eq.s32.totalorder %v67, %v70
    %v72 = vsel %vm71, 1, 0
    %v73 = vcvt.s32.f32 %v72
    %v74 = vld [vmem:[#allocation2] sm:$0xff]
    %v75 = vld [vmem:[#allocation2 + $0x8] sm:$0xff]
    %v76 = vld [vmem:[#allocation2 + $0x10] sm:$0xff]
    %v77 = vld [vmem:[#allocation2 + $0x18] sm:$0xff]
    %v78 = vld [vmem:[#allocation2 + $0x20] sm:$0xff]
    %v79 = vld [vmem:[#allocation2 + $0x28] sm:$0xff]
    %v80 = vld [vmem:[#allocation2 + $0x30] sm:$0xff]
    %v81 = vld [vmem:[#allocation2 + $0x38] sm:$0xff]
    %vm82 = vcmask 523264
    %v84 = vsel %vm82, %v73, 0
    %86 = vmatprep.subr.mxu0 0.0
    %87 = vmatpush1.msra.mxu0 0.0
    %88 = vmatprep.subr.mxu0 0.0
    %89 = vmatpush1.msra.mxu0 0.0
    %90 = vmatprep.subr.mxu0 0.0
    %91 = vmatpush1.msra.mxu0 0.0
    %92 = vmatprep.subr.mxu0 0.0
    %93 = vmatpush1.msra.mxu0 0.0
    %94 = vmatprep.subr.mxu0 0.0
    %95 = vmatpush1.msra.mxu0 0.0
    %96 = vmatprep.subr.mxu0 0.0
    %97 = vmatpush1.msra.mxu0 0.0
    %98 = vmatprep.subr.mxu0 0.0
    %99 = vmatpush1.msra.mxu0 0.0
    %100 = vmatprep.subr.mxu0 0.0
    %101 = vmatpush1.msra.mxu0 0.0
    %102 = vmatprep.subr.mxu0 0.0
    %103 = vmatpush1.msra.mxu0 %v81
    %104 = vmatprep.subr.mxu0 0.0
    %105 = vmatpush1.msra.mxu0 %v80
    %106 = vmatprep.subr.mxu0 0.0
    %107 = vmatpush1.msra.mxu0 %v79
    %108 = vmatprep.subr.mxu0 0.0
    %109 = vmatpush1.msra.mxu0 %v78
    %110 = vmatprep.subr.mxu0 0.0
    %111 = vmatpush1.msra.mxu0 %v77
    %112 = vmatprep.subr.mxu0 0.0
    %113 = vmatpush1.msra.mxu0 %v76
    %114 = vmatprep.subr.mxu0 0.0
    %115 = vmatpush1.msra.mxu0 %v75
    %116 = vmatprep.subr.mxu0 0.0
    %117 = vmatpush1.msra.mxu0 %v74
    %118 = vmatprep.subr.mxu0 0.0
    %119 = vmatpush2.msra.mxu0 0.0
    %120 = vmatprep.subr.mxu0 0.0
    %121 = vmatpush2.msra.mxu0 0.0
    %122 = vmatprep.subr.mxu0 0.0
    %123 = vmatpush2.msra.mxu0 0.0
    %124 = vmatprep.subr.mxu0 0.0
    %125 = vmatpush2.msra.mxu0 0.0
    %126 = vmatprep.subr.mxu0 0.0
    %127 = vmatpush2.msra.mxu0 0.0
    %128 = vmatprep.subr.mxu0 0.0
    %129 = vmatpush2.msra.mxu0 0.0
    %130 = vmatprep.subr.mxu0 0.0
    %131 = vmatpush2.msra.mxu0 0.0
    %132 = vmatprep.subr.mxu0 0.0
    %133 = vmatpush2.msra.mxu0 0.0
    %134 = vmatprep.subr.mxu0 0.0
    %135 = vmatpush2.msra.mxu0 0.0
    %136 = vmatprep.subr.mxu0 0.0
    %137 = vmatpush2.msra.mxu0 0.0
    %138 = vmatprep.subr.mxu0 0.0
    %139 = vmatpush2.msra.mxu0 0.0
    %140 = vmatprep.subr.mxu0 0.0
    %141 = vmatpush2.msra.mxu0 0.0
    %142 = vmatprep.subr.mxu0 0.0
    %143 = vmatpush2.msra.mxu0 0.0
    %144 = vmatprep.subr.mxu0 0.0
    %145 = vmatpush2.msra.mxu0 0.0
    %146 = vmatprep.subr.mxu0 0.0
    %147 = vmatpush2.msra.mxu0 0.0
    %148 = vmatprep.subr.mxu0 0.0
    %149 = vmatpush2.msra.mxu0 0.0
    %150 = vmatprep.mubr.f32.mxu0 0.0
    %151 = vmatmul.mubr.f32.gmra.mxu0 %v84
    %v152 = vpop.f32.mrf.mxu0
    %v153 = vadd.f32 0.0, %v152
    %v154 = vpop.f32.mrf.mxu0
    %155 = vdwg.mxu0
    %v156 = vld [vmem:[#allocation5] sm:$0xff]
    %v157 = vld [vmem:[#allocation5 + $0x8] sm:$0xff]
    %v158 = vld [vmem:[#allocation5 + $0x10] sm:$0xff]
    %v159 = vld [vmem:[#allocation5 + $0x18] sm:$0xff]
    %v160 = vld [vmem:[#allocation5 + $0x20] sm:$0xff]
    %v161 = vld [vmem:[#allocation5 + $0x28] sm:$0xff]
    %v162 = vld [vmem:[#allocation5 + $0x30] sm:$0xff]
    %v163 = vld [vmem:[#allocation5 + $0x38] sm:$0xff]
    %v164 = vld [vmem:[#allocation5 + $0x40] sm:$0xff]
    %v165 = vld [vmem:[#allocation5 + $0x48] sm:$0xff]
    %v166 = vld [vmem:[#allocation5 + $0x50] sm:$0xff]
    %v167 = vld [vmem:[#allocation5 + $0x58] sm:$0xff]
    %v168 = vld [vmem:[#allocation5 + $0x60] sm:$0xff]
    %v169 = vld [vmem:[#allocation5 + $0x68] sm:$0xff]
    %v170 = vld [vmem:[#allocation5 + $0x70] sm:$0xff]
    %v171 = vld [vmem:[#allocation5 + $0x78] sm:$0xff]
    %v172 = vld [vmem:[%s3] sm:$0x1]
    %v174 = vlaneseq
    %v175 = vshrl.u32 %v174, 7
    %v176 = vsub.s32 0, %v175
    %v177 = vrot.slane %v172, %v176
    %179 = vmatprep.subr.mxu0 0.0
    %180 = vmatpush1.msra.mxu0 %v171
    %181 = vmatprep.subr.mxu0 0.0
    %182 = vmatpush1.msra.mxu0 %v170
    %183 = vmatprep.subr.mxu0 0.0
    %184 = vmatpush1.msra.mxu0 %v169
    %185 = vmatprep.subr.mxu0 0.0
    %186 = vmatpush1.msra.mxu0 %v168
    %187 = vmatprep.subr.mxu0 0.0
    %188 = vmatpush1.msra.mxu0 %v167
    %189 = vmatprep.subr.mxu0 0.0
    %190 = vmatpush1.msra.mxu0 %v166
    %191 = vmatprep.subr.mxu0 0.0
    %192 = vmatpush1.msra.mxu0 %v165
    %193 = vmatprep.subr.mxu0 0.0
    %194 = vmatpush1.msra.mxu0 %v164
    %195 = vmatprep.subr.mxu0 0.0
    %196 = vmatpush1.msra.mxu0 %v163
    %197 = vmatprep.subr.mxu0 0.0
    %198 = vmatpush1.msra.mxu0 %v162
    %199 = vmatprep.subr.mxu0 0.0
    %200 = vmatpush1.msra.mxu0 %v161
    %201 = vmatprep.subr.mxu0 0.0
    %202 = vmatpush1.msra.mxu0 %v160
    %203 = vmatprep.subr.mxu0 0.0
    %204 = vmatpush1.msra.mxu0 %v159
    %205 = vmatprep.subr.mxu0 0.0
    %206 = vmatpush1.msra.mxu0 %v158
    %207 = vmatprep.subr.mxu0 0.0
    %208 = vmatpush1.msra.mxu0 %v157
    %209 = vmatprep.subr.mxu0 0.0
    %210 = vmatpush1.msra.mxu0 %v156
    %211 = vmatprep.subr.mxu0 0.0
    %212 = vmatpush2.msra.mxu0 0.0
    %213 = vmatprep.subr.mxu0 0.0
    %214 = vmatpush2.msra.mxu0 0.0
    %215 = vmatprep.subr.mxu0 0.0
    %216 = vmatpush2.msra.mxu0 0.0
    %217 = vmatprep.subr.mxu0 0.0
    %218 = vmatpush2.msra.mxu0 0.0
    %219 = vmatprep.subr.mxu0 0.0
    %220 = vmatpush2.msra.mxu0 0.0
    %221 = vmatprep.subr.mxu0 0.0
    %222 = vmatpush2.msra.mxu0 0.0
    %223 = vmatprep.subr.mxu0 0.0
    %224 = vmatpush2.msra.mxu0 0.0
    %225 = vmatprep.subr.mxu0 0.0
    %226 = vmatpush2.msra.mxu0 0.0
    %227 = vmatprep.subr.mxu0 0.0
    %228 = vmatpush2.msra.mxu0 0.0
    %229 = vmatprep.subr.mxu0 0.0
    %230 = vmatpush2.msra.mxu0 0.0
    %231 = vmatprep.subr.mxu0 0.0
    %232 = vmatpush2.msra.mxu0 0.0
    %233 = vmatprep.subr.mxu0 0.0
    %234 = vmatpush2.msra.mxu0 0.0
    %235 = vmatprep.subr.mxu0 0.0
    %236 = vmatpush2.msra.mxu0 0.0
    %237 = vmatprep.subr.mxu0 0.0
    %238 = vmatpush2.msra.mxu0 0.0
    %239 = vmatprep.subr.mxu0 0.0
    %240 = vmatpush2.msra.mxu0 0.0
    %241 = vmatprep.subr.mxu0 0.0
    %242 = vmatpush2.msra.mxu0 0.0
    %243 = vmatprep.mubr.f32.mxu0 0.0
    %244 = vmatmul.mubr.f32.gmra.mxu0 %v153
    %v245 = vpop.f32.mrf.mxu0
    %v246 = vadd.f32 %v177, %v245
    %v247 = vpop.f32.mrf.mxu0
    %248 = vdwg.mxu0
    %v249 = vxor.u32 %v246, 2147483648
    %v250 = vmul.f32 %v249, 1.442695
    %v251 = vpow.pop %v250
    %v252 = vadd.f32 %v251, 1.0
    %v253 = vrcp.pop %v252
    %v254 = vmul.f32 1.0, %v253
    %v255 = vmul.f32 %v246, %v254
    %v256 = vld [vmem:[#allocation7] sm:$0xff]
    %v257 = vld [vmem:[#allocation7 + $0x8] sm:$0xff]
    %v258 = vld [vmem:[#allocation7 + $0x10] sm:$0xff]
    %v259 = vld [vmem:[#allocation7 + $0x18] sm:$0xff]
    %v260 = vld [vmem:[#allocation7 + $0x20] sm:$0xff]
    %v261 = vld [vmem:[#allocation7 + $0x28] sm:$0xff]
    %v262 = vld [vmem:[#allocation7 + $0x30] sm:$0xff]
    %v263 = vld [vmem:[#allocation7 + $0x38] sm:$0xff]
    %v264 = vld [vmem:[#allocation7 + $0x40] sm:$0xff]
    %v265 = vld [vmem:[#allocation7 + $0x48] sm:$0xff]
    %v266 = vld [vmem:[#allocation7 + $0x50] sm:$0xff]
    %v267 = vld [vmem:[#allocation7 + $0x58] sm:$0xff]
    %v268 = vld [vmem:[#allocation7 + $0x60] sm:$0xff]
    %v269 = vld [vmem:[#allocation7 + $0x68] sm:$0xff]
    %v270 = vld [vmem:[#allocation7 + $0x70] sm:$0xff]
    %v271 = vld [vmem:[#allocation7 + $0x78] sm:$0xff]
    %v272 = vld [vmem:[%s5] sm:$0x1]
    %v274 = vlaneseq
    %v275 = vshrl.u32 %v274, 7
    %v276 = vsub.s32 0, %v275
    %v277 = vrot.slane %v272, %v276
    %279 = vmatprep.subr.mxu0 0.0
    %280 = vmatpush1.msra.mxu0 %v271
    %281 = vmatprep.subr.mxu0 0.0
    %282 = vmatpush1.msra.mxu0 %v270
    %283 = vmatprep.subr.mxu0 0.0
    %284 = vmatpush1.msra.mxu0 %v269
    %285 = vmatprep.subr.mxu0 0.0
    %286 = vmatpush1.msra.mxu0 %v268
    %287 = vmatprep.subr.mxu0 0.0
    %288 = vmatpush1.msra.mxu0 %v267
    %289 = vmatprep.subr.mxu0 0.0
    %290 = vmatpush1.msra.mxu0 %v266
    %291 = vmatprep.subr.mxu0 0.0
    %292 = vmatpush1.msra.mxu0 %v265
    %293 = vmatprep.subr.mxu0 0.0
    %294 = vmatpush1.msra.mxu0 %v264
    %295 = vmatprep.subr.mxu0 0.0
    %296 = vmatpush1.msra.mxu0 %v263
    %297 = vmatprep.subr.mxu0 0.0
    %298 = vmatpush1.msra.mxu0 %v262
    %299 = vmatprep.subr.mxu0 0.0
    %300 = vmatpush1.msra.mxu0 %v261
    %301 = vmatprep.subr.mxu0 0.0
    %302 = vmatpush1.msra.mxu0 %v260
    %303 = vmatprep.subr.mxu0 0.0
    %304 = vmatpush1.msra.mxu0 %v259
    %305 = vmatprep.subr.mxu0 0.0
    %306 = vmatpush1.msra.mxu0 %v258
    %307 = vmatprep.subr.mxu0 0.0
    %308 = vmatpush1.msra.mxu0 %v257
    %309 = vmatprep.subr.mxu0 0.0
    %310 = vmatpush1.msra.mxu0 %v256
    %311 = vmatprep.subr.mxu0 0.0
    %312 = vmatpush2.msra.mxu0 0.0
    %313 = vmatprep.subr.mxu0 0.0
    %314 = vmatpush2.msra.mxu0 0.0
    %315 = vmatprep.subr.mxu0 0.0
    %316 = vmatpush2.msra.mxu0 0.0
    %317 = vmatprep.subr.mxu0 0.0
    %318 = vmatpush2.msra.mxu0 0.0
    %319 = vmatprep.subr.mxu0 0.0
    %320 = vmatpush2.msra.mxu0 0.0
    %321 = vmatprep.subr.mxu0 0.0
    %322 = vmatpush2.msra.mxu0 0.0
    %323 = vmatprep.subr.mxu0 0.0
    %324 = vmatpush2.msra.mxu0 0.0
    %325 = vmatprep.subr.mxu0 0.0
    %326 = vmatpush2.msra.mxu0 0.0
    %327 = vmatprep.subr.mxu0 0.0
    %328 = vmatpush2.msra.mxu0 0.0
    %329 = vmatprep.subr.mxu0 0.0
    %330 = vmatpush2.msra.mxu0 0.0
    %331 = vmatprep.subr.mxu0 0.0
    %332 = vmatpush2.msra.mxu0 0.0
    %333 = vmatprep.subr.mxu0 0.0
    %334 = vmatpush2.msra.mxu0 0.0
    %335 = vmatprep.subr.mxu0 0.0
    %336 = vmatpush2.msra.mxu0 0.0
    %337 = vmatprep.subr.mxu0 0.0
    %338 = vmatpush2.msra.mxu0 0.0
    %339 = vmatprep.subr.mxu0 0.0
    %340 = vmatpush2.msra.mxu0 0.0
    %341 = vmatprep.subr.mxu0 0.0
    %342 = vmatpush2.msra.mxu0 0.0
    %343 = vmatprep.mubr.f32.mxu0 0.0
    %344 = vmatmul.mubr.f32.gmra.mxu0 %v255
    %v345 = vpop.f32.mrf.mxu0
    %v346 = vadd.f32 %v277, %v345
    %v347 = vpop.f32.mrf.mxu0
    %348 = vdwg.mxu0
    %349 = vst [vmem:[#allocation8] sm:$0xff] %v346
    // Predicated region
    $region38: #{tpu_custom_call.1} parent=1 // pred_check
      _
    $region39: #{tpu_custom_call.1} parent=1 // pred_check_branch
      %351 = sbr.rel (0) target = $region41
    $region40: #{tpu_custom_call.1} parent=1 // pred_region
      %s353 = ssub.s32 128, 128
      %354 = vsyncadd [#allocation4], %s353
      %s356 = sshll.u32 [#allocation8], 4
      %s357 = int_to_ptr.vmem [resolvable:$true] %s356
      %359 = dma.vmem_to_hbm [thread:$0]  %s357, 128, %s6, [#allocation4]
    $region41: #{tpu_custom_call.1} parent=1 // pred_fallthru
      _
    // Predicated region
    $region42: #{tpu_custom_call.1} parent=1 // pred_check
      _
    $region43: #{tpu_custom_call.1} parent=1 // pred_check_branch
      %361 = sbr.rel (0) target = $region45
    $region44: #{tpu_custom_call.1} parent=1 // pred_region
      %362 = dma.done [#allocation4], 128
    $region45: #{tpu_custom_call.1} parent=1 // pred_fallthru
      _
    %363 = vsyncpa [#allocation3], 1
    %364 = vsyncpa [#allocation6], 1
    %365 = vsyncpa [#allocation4], 1

</llo_original>
